<compile_context>
chip_gen: v7x
topology: tpu7x:2x2x1
jax: 0.10.0
libtpu: 0.0.40
codegen_flags: <defaults>
</compile_context>

<pallas_src>
import functools

import jax
import jax.numpy as jnp
from jax import lax
from jax.experimental import pallas as pl
from jax.experimental.pallas import tpu as pltpu

GAMMA = 2.0  # loss_config = {'type': 'focal', 'gamma': 2.0}


def _focal_loss_kernel(logits_ref, target_ref, out_ref, acc_ref, *,
                       gamma, n_rows, tile_m):
    i = pl.program_id(0)
    n_tiles = pl.num_programs(0)

    @pl.when(i == 0)
    def _init():
        acc_ref[...] = jnp.zeros_like(acc_ref)

    x = logits_ref[...].astype(jnp.float32)          # (TM, C), math in f32
    t = target_ref[...]                               # (TM, 1) int32

    # Numerically-stable log-softmax pieces: ce_i = logsumexp(x_i) - x_i[t_i]
    m = jnp.max(x, axis=-1, keepdims=True)                                   # (TM, 1)
    lse = m + jnp.log(jnp.sum(jnp.exp(x - m), axis=-1, keepdims=True))       # (TM, 1)

    class_ids = lax.broadcasted_iota(jnp.int32, x.shape, 1)                  # (TM, C)
    tgt_logit = jnp.sum(jnp.where(class_ids == t, x, 0.0),
                        axis=-1, keepdims=True)                              # (TM, 1)

    ce = lse - tgt_logit                              # (TM, 1) per-sample CE
    pt = jnp.exp(-ce)                                 # (TM, 1)
    one_minus_pt = 1.0 - pt
    if float(gamma) == float(int(gamma)):
        # Integer exponent: pure VPU multiplies (for gamma=2.0 this is w*w).
        w = lax.integer_pow(one_minus_pt, int(gamma))
    else:
        w = one_minus_pt ** jnp.float32(gamma)        # fallback: EUP pow
    focal = w * ce                                    # (TM, 1)

    # Mask out remainder/padded rows so they don't contribute to the sum.
    row = lax.broadcasted_iota(jnp.int32, (tile_m, 1), 0) + i * tile_m
    focal = jnp.where(row < n_rows, focal, 0.0)

    acc_ref[...] = acc_ref[...] + jnp.sum(focal)

    @pl.when(i == n_tiles - 1)
    def _finalize():
        # reduction='mean' over the true number of rows.
        out_ref[...] = acc_ref[...] / jnp.float32(n_rows)


def _choose_tile_m(n, c, itemsize):
    # Keep the double-buffered logits tile under ~8 MiB so it pipelines on
    # every generation's scoped-VMEM default (v5e 16 MiB, v6e 32, v7x 32).
    budget = 8 * 1024 * 1024
    tm = budget // max(1, 2 * c * itemsize)
    tm = min(1024, max(8, (tm // 8) * 8))
    # Don't tile far beyond N (avoids useless padding work for small batches).
    tm = min(tm, ((n + 7) // 8) * 8)
    return max(8, tm)


def focal_loss(logits, targets, gamma=GAMMA, tile_m=None):
    """logits: (N, C) float32/bfloat16, targets: (N,) int indices. Returns scalar."""
    n, c = logits.shape
    targets2d = targets.astype(jnp.int32).reshape(n, 1)
    if tile_m is None:
        tile_m = _choose_tile_m(n, c, jnp.dtype(logits.dtype).itemsize)
    grid = (pl.cdiv(n, tile_m),)

    # TODO(synk): for vocab-sized C (>=16K), also tile the C axis with an
    # online logsumexp (running max/sum scratch) so the row block fits VMEM.
    # TODO(synk): optional per-class `weight` (module default is None) not implemented.
    out = pl.pallas_call(
        functools.partial(_focal_loss_kernel, gamma=gamma, n_rows=n,
                          tile_m=tile_m),
        out_shape=jax.ShapeDtypeStruct((1, 1), jnp.float32),
        grid_spec=pltpu.PrefetchScalarGridSpec(
            num_scalar_prefetch=0,
            grid=grid,
            in_specs=[
                pl.BlockSpec((tile_m, c), lambda i: (i, 0)),
                pl.BlockSpec((tile_m, 1), lambda i: (i, 0)),
            ],
            out_specs=pl.BlockSpec((1, 1), lambda i: (0, 0)),
            scratch_shapes=[pltpu.VMEM((1, 1), jnp.float32)],
        ),
        compiler_params=pltpu.CompilerParams(
            dimension_semantics=("arbitrary",)),
    )(logits, targets2d)
    return out[0, 0]


def focal_loss_ref(logits, targets, gamma=GAMMA):
    # Pure-JAX reference (mirrors torch.nn.CrossEntropyLoss(reduction='none') + focal).
    logp = jax.nn.log_softmax(logits.astype(jnp.float32), axis=-1)
    ce = -jnp.take_along_axis(logp, targets[:, None].astype(jnp.int32), axis=-1)[:, 0]
    pt = jnp.exp(-ce)
    return jnp.mean((1.0 - pt) ** gamma * ce)


if __name__ == "__main__":
    key = jax.random.PRNGKey(0)
    k_logits, k_tgt = jax.random.split(key)

    # N deliberately NOT a multiple of the tile to exercise remainder masking;
    # tile_m=16 forces a multi-step grid even at this small size.
    N, C = 50, 32
    logits = jax.random.normal(k_logits, (N, C), dtype=jnp.float32)
    targets = jax.random.randint(k_tgt, (N,), 0, C, dtype=jnp.int32)

    loss = jax.block_until_ready(focal_loss(logits, targets, tile_m=16))
    ref = jax.block_until_ready(focal_loss_ref(logits, targets))
    assert jnp.allclose(loss, ref, rtol=1e-5, atol=1e-5), (loss, ref)

    # bf16 logits path (halves HBM traffic); in-kernel math stays f32.
    logits_bf16 = logits.astype(jnp.bfloat16)
    loss_bf16 = jax.block_until_ready(focal_loss(logits_bf16, targets, tile_m=16))
    ref_bf16 = jax.block_until_ready(
        focal_loss_ref(logits_bf16.astype(jnp.float32), targets))
    assert jnp.allclose(loss_bf16, ref_bf16, rtol=1e-3, atol=1e-3), (loss_bf16, ref_bf16)

    print("KERNEL_OK")
</pallas_src>

<mosaic_0001>
module attributes {stable_mosaic.version = 11 : i64} {
  func.func @_focal_loss_kernel(%arg0: i32, %arg1: memref<16x32xf32, #tpu.memory_space<vmem>>, %arg2: memref<16x1xi32, #tpu.memory_space<vmem>>, %arg3: memref<1x1xf32, #tpu.memory_space<vmem>>, %arg4: memref<1x1xf32, #tpu.memory_space<vmem>>) attributes {dimension_semantics = [#tpu.dimension_semantics<arbitrary>], iteration_bounds = array<i64: 4>, scalar_prefetch = 0 : i64, scratch_operands = 1 : i64, tpu.core_type = #tpu.core_type<tc>, window_params = [{transform_indices = @transform_0, window_bounds = array<i64: 16, 32>}, {transform_indices = @transform_1, window_bounds = array<i64: 16, 1>}, {pipeline_mode = #tpu.pipeline_mode<synchronous>, transform_indices = @transform_2, window_bounds = array<i64: 1, 1>}]} {
    %c0_i32 = arith.constant 0 : i32
    %0 = arith.cmpi eq, %arg0, %c0_i32 : i32
    %1 = arith.extui %0 : i1 to i32
    %c0_i32_0 = arith.constant 0 : i32
    %2 = arith.cmpi ne, %1, %c0_i32_0 : i32
    scf.if %2 {
      %cst_16 = arith.constant 0.000000e+00 : f32
      %48 = vector.broadcast %cst_16 : f32 to vector<1x1xf32>
      %c0_17 = arith.constant 0 : index
      %c0_18 = arith.constant 0 : index
      %49 = vector.load %arg4[%c0_17, %c0_18] : memref<1x1xf32, #tpu.memory_space<vmem>>, vector<1x1xf32>
      tpu.vector_store %arg4[%c0_17, %c0_18], %48 {strides = array<i32>} : memref<1x1xf32, #tpu.memory_space<vmem>>, vector<1x1xf32>,
    } else {
    }
    %c0 = arith.constant 0 : index
    %c0_1 = arith.constant 0 : index
    %3 = vector.load %arg1[%c0, %c0_1] : memref<16x32xf32, #tpu.memory_space<vmem>>, vector<16x32xf32>
    %c0_2 = arith.constant 0 : index
    %c0_3 = arith.constant 0 : index
    %4 = vector.load %arg2[%c0_2, %c0_3] : memref<16x1xi32, #tpu.memory_space<vmem>>, vector<16x1xi32>
    %cst = arith.constant dense<0xFF800000> : vector<16xf32>
    %5 = vector.multi_reduction <maximumf>, %3, %cst [1] : vector<16x32xf32> to vector<16xf32>
    %6 = vector.shape_cast %5 : vector<16xf32> to vector<16x1xf32>
    %7 = vector.broadcast %6 : vector<16x1xf32> to vector<16x32xf32>
    %8 = arith.subf %3, %7 : vector<16x32xf32>
    %9 = math.exp %8 : vector<16x32xf32>
    %cst_4 = arith.constant dense<0.000000e+00> : vector<16xf32>
    %10 = vector.multi_reduction <add>, %9, %cst_4 [1] : vector<16x32xf32> to vector<16xf32>
    %11 = vector.shape_cast %10 : vector<16xf32> to vector<16x1xf32>
    %12 = math.log %11 : vector<16x1xf32>
    %13 = arith.addf %6, %12 : vector<16x1xf32>
    %14 = tpu.iota {dimensions = array<i32: 1>} : vector<16x32xi32>
    %15 = vector.broadcast %4 : vector<16x1xi32> to vector<16x32xi32>
    %16 = arith.cmpi eq, %14, %15 : vector<16x32xi32>
    %cst_5 = arith.constant 0.000000e+00 : f32
    %17 = vector.broadcast %cst_5 : f32 to vector<16x32xf32>
    %18 = arith.select %16, %3, %17 : vector<16x32xi1>, vector<16x32xf32>
    %cst_6 = arith.constant dense<0.000000e+00> : vector<16xf32>
    %19 = vector.multi_reduction <add>, %18, %cst_6 [1] : vector<16x32xf32> to vector<16xf32>
    %20 = vector.shape_cast %19 : vector<16xf32> to vector<16x1xf32>
    %21 = arith.subf %13, %20 : vector<16x1xf32>
    %cst_7 = arith.constant 0.000000e+00 : f32
    %22 = vector.broadcast %cst_7 : f32 to vector<16x1xf32>
    %23 = arith.subf %22, %21 : vector<16x1xf32>
    %24 = math.exp %23 : vector<16x1xf32>
    %cst_8 = arith.constant 1.000000e+00 : f32
    %25 = vector.broadcast %cst_8 : f32 to vector<16x1xf32>
    %26 = arith.subf %25, %24 : vector<16x1xf32>
    %27 = arith.mulf %26, %26 : vector<16x1xf32>
    %28 = arith.mulf %27, %21 : vector<16x1xf32>
    %29 = tpu.iota {dimensions = array<i32: 0>} : vector<16x1xi32>
    %c16_i32 = arith.constant 16 : i32
    %30 = arith.muli %arg0, %c16_i32 : i32
    %31 = vector.broadcast %30 : i32 to vector<16x1xi32>
    %32 = arith.addi %29, %31 : vector<16x1xi32>
    %c50_i32 = arith.constant 50 : i32
    %33 = vector.broadcast %c50_i32 : i32 to vector<16x1xi32>
    %34 = arith.cmpi slt, %32, %33 : vector<16x1xi32>
    %cst_9 = arith.constant 0.000000e+00 : f32
    %35 = vector.broadcast %cst_9 : f32 to vector<16x1xf32>
    %36 = arith.select %34, %28, %35 : vector<16x1xi1>, vector<16x1xf32>
    %c0_10 = arith.constant 0 : index
    %c0_11 = arith.constant 0 : index
    %37 = vector.load %arg4[%c0_10, %c0_11] : memref<1x1xf32, #tpu.memory_space<vmem>>, vector<1x1xf32>
    %38 = vector.shape_cast %36 : vector<16x1xf32> to vector<1x16x1xf32>
    %cst_12 = arith.constant dense<0.000000e+00> : vector<1xf32>
    %39 = vector.multi_reduction <add>, %38, %cst_12 [1, 2] : vector<1x16x1xf32> to vector<1xf32>
    %40 = vector.shape_cast %39 : vector<1xf32> to vector<1x1x1xf32>
    %41 = vector.extract %40[0, 0, 0] : f32 from vector<1x1x1xf32>
    %42 = vector.broadcast %41 : f32 to vector<1x1xf32>
    %43 = arith.addf %37, %42 : vector<1x1xf32>
    %c0_13 = arith.constant 0 : index
    %c0_14 = arith.constant 0 : index
    %44 = vector.load %arg4[%c0_13, %c0_14] : memref<1x1xf32, #tpu.memory_space<vmem>>, vector<1x1xf32>
    tpu.vector_store %arg4[%c0_13, %c0_14], %43 {strides = array<i32>} : memref<1x1xf32, #tpu.memory_space<vmem>>, vector<1x1xf32>,
    %c3_i32 = arith.constant 3 : i32
    %45 = arith.cmpi eq, %arg0, %c3_i32 : i32
    %46 = arith.extui %45 : i1 to i32
    %c0_i32_15 = arith.constant 0 : i32
    %47 = arith.cmpi ne, %46, %c0_i32_15 : i32
    scf.if %47 {
      %c0_16 = arith.constant 0 : index
      %c0_17 = arith.constant 0 : index
      %48 = vector.load %arg4[%c0_16, %c0_17] : memref<1x1xf32, #tpu.memory_space<vmem>>, vector<1x1xf32>
      %cst_18 = arith.constant 5.000000e+01 : f32
      %49 = vector.broadcast %cst_18 : f32 to vector<1x1xf32>
      %50 = arith.divf %48, %49 : vector<1x1xf32>
      %c0_19 = arith.constant 0 : index
      %c0_20 = arith.constant 0 : index
      %51 = vector.load %arg3[%c0_19, %c0_20] : memref<1x1xf32, #tpu.memory_space<vmem>>, vector<1x1xf32>
      tpu.vector_store %arg3[%c0_19, %c0_20], %50 {strides = array<i32>} : memref<1x1xf32, #tpu.memory_space<vmem>>, vector<1x1xf32>,
    } else {
    }
    return
  }
  func.func @transform_0(%arg0: i32) -> (i32, i32) {
    %c0_i32 = arith.constant 0 : i32
    %c0_i32_0 = arith.constant 0 : i32
    return %arg0, %c0_i32 : i32, i32
  }
  func.func @transform_1(%arg0: i32) -> (i32, i32) {
    %c0_i32 = arith.constant 0 : i32
    %c0_i32_0 = arith.constant 0 : i32
    return %arg0, %c0_i32 : i32, i32
  }
  func.func @transform_2(%arg0: i32) -> (i32, i32) {
    %c0_i32 = arith.constant 0 : i32
    %c0_i32_0 = arith.constant 0 : i32
    %c0_i32_1 = arith.constant 0 : i32
    return %c0_i32, %c0_i32_0 : i32, i32
  }
}

</mosaic_0001>

<llo_original>
// kernel: tpu_custom_call.1
$region0: #{tpu_custom_call.1}
  #allocation0 [shape = 'u32[]', space=smem, size = 0x4, offset = 0x4, fixed_abs, tag = 'smem constant byte address 0x4 - core index']
  #allocation1 [shape = 'u32[144,128]{1,0:T(1,128)}', space=vmem, size = 0x12000, scoped, tag = 'internal scratch']
  #allocation2 [shape = 'f32[1,1]{1,0:T(1,128)}', space=vmem, size = 0x200, scoped, tag = 'scratch operand']
  %s0 = inlined_call_operand.vmem [shape: f32[50,32], index: 0, kind: input, shape index: {}]
  %s1 = inlined_call_operand.vmem [shape: s32[50,1], index: 1, kind: input, shape index: {}]
  %s2 = inlined_call_operand.hbm [shape: f32[1,1], index: 2, kind: output, shape index: {}]
  %s3 = sld [smem:[#allocation0]]
  $region49: #{tpu_custom_call.1} parent=0
    _
  %s5 = ssub.s32 1, %s3
  %s6 = scalar_select 0, %s5, %s3
  $region1: #{tpu_custom_call.1} parent=0
    #allocation3 [shape = 'u8[512]{0}', space=vmem, size = 0x400, scoped, tag = 'output window, operand 0, single buffered']
    #allocation4 [shape = 's32[2]{0}', space=sflag, size = 0x8, scoped, tag = 'scoped memory for tpu_custom_call.1']
    %7 = vsyncpa [#allocation4], 0
    loop: start=0, step=1, limit=6
    $region2: #{tpu_custom_call.1} parent=1 // loop_pre_header
      _
    $region3: #{tpu_custom_call.1} parent=1 // loop_header
      %s9 = sphi 0, %s13
      %p10 = scmp.ge.s32.totalorder %s9, 6
      %s19 = sphi 0, %s21
      %s22 = sphi 0, %s19
      %s23 = sphi 0, %s22
      %s39 = sphi 0, %s23
      %s45 = sphi 0, %s47
      %s48 = sphi 0, %s45
      %s49 = sphi 0, %s48
      %s65 = sphi 0, %s49
      %s69 = sphi 0, %s69
      %s71 = sphi 0, %s69
      %s72 = sphi 0, %s71
      %s86 = sphi 0, %s72
    $region4: #{tpu_custom_call.1} parent=1 // loop_header_branch
      %12 = sbr.rel (%p10) target = $region8
    $region5: #{tpu_custom_call.1} parent=1 // loop_body
      %s14 = ssub.s32 %s9, 1
      %s15 = ssub.s32 %s9, 2
      %s16 = sadd.s32 %s9, 1
      %s17 = ssub.s32 %s9, %s16
      %p18 = scmp.eq.s32.totalorder %s17, 0
      %s20 = sadd.s32 %s19, 1
      %s21 = scalar_select %p18, %s19, %s20
      %p24 = pneg %p18
      %p25 = scmp.eq.s32.totalorder %s9, 3
      %p26 = por %p24, %p25
      %p27 = scmp.ne.s32.totalorder %s19, %s22
      %p28 = scmp.eq.s32.totalorder %s9, 0
      %p29 = por %p27, %p28
      %p30 = scmp.ne.s32.totalorder %s19, %s22
      %p31 = scmp.eq.s32.totalorder %s14, 3
      %p32 = por %p30, %p31
      %p33 = scmp.ne.s32.totalorder %s22, %s23
      %p34 = scmp.eq.s32.totalorder %s14, 0
      %p35 = por %p33, %p34
      %p36 = scmp.ne.s32.totalorder %s22, %s23
      %p37 = scmp.eq.s32.totalorder %s15, 3
      %p38 = por %p36, %p37
      %p40 = scmp.ne.s32.totalorder %s23, %s39
      %p41 = scmp.eq.s32.totalorder %s15, 0
      %p42 = por %p40, %p41
      %s43 = ssub.s32 %s9, %s16
      %p44 = scmp.eq.s32.totalorder %s43, 0
      %s46 = sadd.s32 %s45, 1
      %s47 = scalar_select %p44, %s45, %s46
      %p50 = pneg %p44
      %p51 = scmp.eq.s32.totalorder %s9, 3
      %p52 = por %p50, %p51
      %p53 = scmp.ne.s32.totalorder %s45, %s48
      %p54 = scmp.eq.s32.totalorder %s9, 0
      %p55 = por %p53, %p54
      %p56 = scmp.ne.s32.totalorder %s45, %s48
      %p57 = scmp.eq.s32.totalorder %s14, 3
      %p58 = por %p56, %p57
      %p59 = scmp.ne.s32.totalorder %s48, %s49
      %p60 = scmp.eq.s32.totalorder %s14, 0
      %p61 = por %p59, %p60
      %p62 = scmp.ne.s32.totalorder %s48, %s49
      %p63 = scmp.eq.s32.totalorder %s15, 3
      %p64 = por %p62, %p63
      %p66 = scmp.ne.s32.totalorder %s49, %s65
      %p67 = scmp.eq.s32.totalorder %s15, 0
      %p68 = por %p66, %p67
      %s70 = sadd.s32 %s69, 1
      %p73 = scmp.eq.s32.totalorder %s9, 3
      %p74 = scmp.ne.s32.totalorder %s69, %s71
      %p75 = scmp.eq.s32.totalorder %s9, 0
      %p76 = por %p74, %p75
      %p77 = scmp.ne.s32.totalorder %s69, %s71
      %p78 = scmp.eq.s32.totalorder %s14, 3
      %p79 = por %p77, %p78
      %p80 = scmp.ne.s32.totalorder %s71, %s72
      %p81 = scmp.eq.s32.totalorder %s14, 0
      %p82 = por %p80, %p81
      %p83 = scmp.ne.s32.totalorder %s71, %s72
      %p84 = scmp.eq.s32.totalorder %s15, 3
      %p85 = por %p83, %p84
      %p87 = scmp.ne.s32.totalorder %s72, %s86
      %p88 = scmp.eq.s32.totalorder %s15, 0
      %p89 = por %p87, %p88
      %p90 = scmp.le.s32.totalorder 1, %s9
      %p91 = scmp.lt.s32.totalorder %s9, 5
      %p92 = pnand %p90, %p91
      %p93 = pneg %p92
      // Predicated region
      $region9: #{tpu_custom_call.1} parent=5 // pred_check
        _
      $region10: #{tpu_custom_call.1} parent=5 // pred_check_branch
        %95 = sbr.rel (%p92) target = $region12
      $region11: #{tpu_custom_call.1} parent=5 // pred_region
        %s96 = ssub.s32 %s9, 1
      $region12: #{tpu_custom_call.1} parent=5 // pred_fallthru
        _
      %p97 = scmp.lt.s32.totalorder %s9, 4
      // Predicated region
      $region13: #{tpu_custom_call.1} parent=5 // pred_check
        %p98 = pneg %p97
      $region14: #{tpu_custom_call.1} parent=5 // pred_check_branch
        %100 = sbr.rel (%p98) target = $region16
      $region15: #{tpu_custom_call.1} parent=5 // pred_region
        // Predicated region
        $region17: #{tpu_custom_call.1} parent=15 // pred_check
          %p101 = pneg %p29
        $region18: #{tpu_custom_call.1} parent=15 // pred_check_branch
          %103 = sbr.rel (%p101) target = $region20
        $region19: #{tpu_custom_call.1} parent=15 // pred_region
          %s104 = smul.u32 2, %s9
          %s105 = ssub.s32 7, %s104
          %p106 = scmp.lt.s32.totalorder %s105, 2
          %s107 = scalar_select %p106, %s105, 2
          %s108 = smul.u32 128, %s107
          %p109 = scmp.lt.s32.totalorder %s104, 6
          %s110 = scalar_select %p109, %s104, 6
          %s111 = smul.addr %s110, 8
          %s112 = scalar_lea.vmem %s0, %s111
          %s113 = smul.u32 2, %s9
          %s114 = ssub.s32 7, %s113
          %p115 = scmp.lt.s32.totalorder %s114, 2
          %s116 = scalar_select %p115, %s114, 2
          %s117 = smul.u32 128, %s116
        $region20: #{tpu_custom_call.1} parent=15 // pred_fallthru
          _
        // Predicated region
        $region21: #{tpu_custom_call.1} parent=15 // pred_check
          %p118 = pneg %p55
        $region22: #{tpu_custom_call.1} parent=15 // pred_check_branch
          %120 = sbr.rel (%p118) target = $region24
        $region23: #{tpu_custom_call.1} parent=15 // pred_region
          %s121 = smul.u32 2, %s9
          %s122 = ssub.s32 7, %s121
          %p123 = scmp.lt.s32.totalorder %s122, 2
          %s124 = scalar_select %p123, %s122, 2
          %s125 = smul.u32 128, %s124
          %p126 = scmp.lt.s32.totalorder %s121, 6
          %s127 = scalar_select %p126, %s121, 6
          %s128 = smul.addr %s127, 8
          %s129 = scalar_lea.vmem %s1, %s128
          %s130 = smul.u32 2, %s9
          %s131 = ssub.s32 7, %s130
          %p132 = scmp.lt.s32.totalorder %s131, 2
          %s133 = scalar_select %p132, %s131, 2
          %s134 = smul.u32 128, %s133
        $region24: #{tpu_custom_call.1} parent=15 // pred_fallthru
          _
      $region16: #{tpu_custom_call.1} parent=5 // pred_fallthru
        _
      %p135 = scmp.le.s32.totalorder 1, %s9
      %p136 = scmp.lt.s32.totalorder %s9, 5
      %p137 = pnand %p135, %p136
      %p138 = pneg %p137
      // Predicated region
      $region25: #{tpu_custom_call.1} parent=5 // pred_check
        _
      $region26: #{tpu_custom_call.1} parent=5 // pred_check_branch
        %140 = sbr.rel (%p137) target = $region28
      $region27: #{tpu_custom_call.1} parent=5 // pred_region
        %s141 = ssub.s32 %s9, 1
        %s142 = smul.u32 2, %s14
        %s143 = ssub.s32 7, %s142
        %p144 = scmp.lt.s32.totalorder %s143, 2
        %s145 = scalar_select %p144, %s143, 2
        %s146 = smul.u32 128, %s145
        %p147 = scmp.lt.s32.totalorder %s142, 6
        %s148 = scalar_select %p147, %s142, 6
        %s149 = smul.addr %s148, 8
        %s150 = scalar_lea.vmem %s0, %s149
        %p151 = pneg %p35
        %p152 = pneg %p32
        %s153 = smul.u32 2, %s14
        %s154 = ssub.s32 7, %s153
        %p155 = scmp.lt.s32.totalorder %s154, 2
        %s156 = scalar_select %p155, %s154, 2
        %s157 = smul.u32 128, %s156
        %p158 = scmp.lt.s32.totalorder %s153, 6
        %s159 = scalar_select %p158, %s153, 6
        %s160 = smul.addr %s159, 8
        %s161 = scalar_lea.vmem %s1, %s160
        %p162 = pneg %p61
        %p163 = pneg %p58
        %p164 = pneg %p82
        %p165 = pneg %p79
        %s166 = smul.u32 2, %s14
        %s167 = ssub.s32 7, %s166
        %p168 = scmp.lt.s32.totalorder %s167, 2
        %s169 = scalar_select %p168, %s167, 2
        %s170 = smul.u32 128, %s169
        %p171 = scmp.lt.s32.totalorder %s166, 6
        %s172 = scalar_select %p171, %s166, 6
        %s173 = smul.addr %s172, 8
        %s174 = scalar_lea.vmem %s0, %s173
        %s175 = smul.u32 2, %s14
        %s176 = ssub.s32 7, %s175
        %p177 = scmp.lt.s32.totalorder %s176, 2
        %s178 = scalar_select %p177, %s176, 2
        %s179 = smul.u32 128, %s178
        %s180 = smul.u32 2, %s14
        %s181 = ssub.s32 7, %s180
        %p182 = scmp.lt.s32.totalorder %s181, 2
        %s183 = scalar_select %p182, %s181, 2
        %s184 = smul.u32 128, %s183
        %p185 = scmp.lt.s32.totalorder %s180, 6
        %s186 = scalar_select %p185, %s180, 6
        %s187 = smul.addr %s186, 8
        %s188 = scalar_lea.vmem %s1, %s187
        %s189 = smul.u32 2, %s14
        %s190 = ssub.s32 7, %s189
        %p191 = scmp.lt.s32.totalorder %s190, 2
        %s192 = scalar_select %p191, %s190, 2
        %s193 = smul.u32 128, %s192
        %p194 = scmp.eq.s32.totalorder %s14, 0
        // Predicated region
        $region29: #{tpu_custom_call.1} parent=27 // pred_check
          %p195 = pneg %p194
        $region30: #{tpu_custom_call.1} parent=27 // pred_check_branch
          %197 = sbr.rel (%p195) target = $region32
        $region31: #{tpu_custom_call.1} parent=27 // pred_region
          %vm198 = vcmask 0
          %199 = vst.msk [vmem:[#allocation2] sm:$0x1] %vm198, 0.0
        $region32: #{tpu_custom_call.1} parent=27 // pred_fallthru
          _
        %v200 = vld [vmem:[%s174] sm:$0xff]
        %v201 = vld [vmem:[%s174 + $0x8] sm:$0xff]
        %v202 = vld [vmem:[%s188] sm:$0xff]
        %v203 = vld [vmem:[%s188 + $0x8] sm:$0xff]
        %vm204 = vcmask 261120
        %v205 = vsel %vm204, %v200, -inf
        %206 = vmax.xlane.f32.xlu0 %v205
        %v207 = vpop.xlane.xlu0 %206
        %v208 = vsel %vm204, %v201, -inf
        %209 = vmax.xlane.f32.xlu0 %v208
        %v210 = vpop.xlane.xlu0 %209
        %v211 = vsub.f32 %v200, %v207
        %v212 = vsub.f32 %v201, %v210
        %v213 = vmul.f32 %v211, 1.442695
        %v214 = vpow.pop %v213
        %v215 = vmul.f32 %v212, 1.442695
        %v216 = vpow.pop %v215
        %v217 = vsel %vm204, %v214, 0.0
        %218 = vadd.xlane.f32.xlu0 %v217
        %v219 = vpop.xlane.xlu0 %218
        %v220 = vsel %vm204, %v216, 0.0
        %221 = vadd.xlane.f32.xlu0 %v220
        %v222 = vpop.xlane.xlu0 %221
        %v223 = vlog2.pop %v219
        %v224 = vmul.f32 %v223, 0.6931472
        %v225 = vlog2.pop %v222
        %v226 = vmul.f32 %v225, 0.6931472
        %v227 = vadd.f32 %v207, %v224
        %v228 = vadd.f32 %v210, %v226
        %v229 = vlaneseq
        %v230 = vand.u32 %v229, 127
        %231 = vset.pattern.permute.xlu0 0
        %232 = vperm.xlu0 %231, %v202
        %v233 = vpop.permute.xlu0 %232
        %234 = vset.pattern.permute.xlu0 0
        %235 = vperm.xlu0 %234, %v203
        %v236 = vpop.permute.xlu0 %235
        %vm237 = vcmp.eq.s32.totalorder %v230, %v233
        %vm238 = vcmp.eq.s32.totalorder %v230, %v236
        %v239 = vsel %vm237, %v200, 0.0
        %v240 = vsel %vm238, %v201, 0.0
        %v241 = vsel %vm204, %v239, 0.0
        %242 = vadd.xlane.f32.xlu0 %v241
        %v243 = vpop.xlane.xlu0 %242
        %v244 = vsel %vm204, %v240, 0.0
        %245 = vadd.xlane.f32.xlu0 %v244
        %v246 = vpop.xlane.xlu0 %245
        %v247 = vsub.f32 %v227, %v243
        %v248 = vsub.f32 %v228, %v246
        %v249 = vsub.f32 0.0, %v247
        %v250 = vsub.f32 0.0, %v248
        %v251 = vmul.f32 %v249, 1.442695
        %v252 = vpow.pop %v251
        %v253 = vmul.f32 %v250, 1.442695
        %v254 = vpow.pop %v253
        %v255 = vsub.f32 1.0, %v252
        %v256 = vsub.f32 1.0, %v254
        %v257 = vmul.f32 %v255, %v255
        %v258 = vmul.f32 %v256, %v256
        %v259 = vmul.f32 %v257, %v247
        %v260 = vmul.f32 %v258, %v248
        %v261 = vlaneseq
        %v262 = vshrl.u32 %v261, 7
        %v263 = vadd.s32 %v262, 8
        %s264 = smul.u32 %s14, 16
        %v265 = vstv %s264
        %v266 = vadd.s32 %v262, %v265
        %v267 = vadd.s32 %v263, %v265
        %vm268 = vcmp.lt.s32.totalorder %v266, 50
        %vm269 = vcmp.lt.s32.totalorder %v267, 50
        %v270 = vsel %vm268, %v259, 0.0
        %v271 = vsel %vm269, %v260, 0.0
        %v272 = vld [vmem:[#allocation2] sm:$0x1]
        %vm273 = vcmask 7168
        %v274 = vsel %vm273, %v270, 0.0
        %v275 = vsel %vm273, %v271, 0.0
        %v276 = vadd.f32 %v274, %v275
        %277 = vadd.xlane.f32.xlu0 %v276
        %v278 = vpop.xlane.xlu0 %277
        %v279 = vrot.slane %v278, 4
        %v280 = vadd.f32 %v278, %v279
        %v281 = vrot.slane %v280, 2
        %v282 = vadd.f32 %v280, %v281
        %v283 = vrot.slane %v282, 1
        %v284 = vadd.f32 %v282, %v283
        %s285 = vtos %v284
        %v286 = vstv %s285
        %v287 = vadd.f32 %v272, %v286
        %vm288 = vcmask 0
        %289 = vst.msk [vmem:[#allocation2] sm:$0x1] %vm288, %v287
        %p290 = scmp.eq.s32.totalorder %s14, 3
        // Predicated region
        $region33: #{tpu_custom_call.1} parent=27 // pred_check
          %p291 = pneg %p290
        $region34: #{tpu_custom_call.1} parent=27 // pred_check_branch
          %293 = sbr.rel (%p291) target = $region36
        $region35: #{tpu_custom_call.1} parent=27 // pred_region
          %v294 = vld [vmem:[#allocation2] sm:$0x1]
          %v295 = vrcp.pop 50.0
          %v296 = vmul.f32 %v294, %v295
          %297 = vst.msk [vmem:[#allocation3] sm:$0x1] %vm288, %v296
        $region36: #{tpu_custom_call.1} parent=27 // pred_fallthru
          _
        // Predicated region
        $region37: #{tpu_custom_call.1} parent=27 // pred_check
          %p298 = pneg %p79
        $region38: #{tpu_custom_call.1} parent=27 // pred_check_branch
          %300 = sbr.rel (%p298) target = $region40
        $region39: #{tpu_custom_call.1} parent=27 // pred_region
          %s302 = ssub.s32 16, 16
          %303 = vsyncadd [#allocation4], %s302
          %s305 = sshll.u32 [#allocation3], 4
          %s306 = int_to_ptr.vmem [resolvable:$true] %s305
          %308 = dma.vmem_to_hbm [thread:$0]  %s306, 16, %s2, [#allocation4]
        $region40: #{tpu_custom_call.1} parent=27 // pred_fallthru
          _
        // Predicated region
        $region41: #{tpu_custom_call.1} parent=27 // pred_check
          %p309 = pneg %p79
        $region42: #{tpu_custom_call.1} parent=27 // pred_check_branch
          %311 = sbr.rel (%p309) target = $region44
        $region43: #{tpu_custom_call.1} parent=27 // pred_region
          %312 = dma.done [#allocation4], 16
        $region44: #{tpu_custom_call.1} parent=27 // pred_fallthru
          _
      $region28: #{tpu_custom_call.1} parent=5 // pred_fallthru
        _
      %p313 = scmp.le.s32.totalorder 2, %s9
      // Predicated region
      $region45: #{tpu_custom_call.1} parent=5 // pred_check
        %p314 = pneg %p313
      $region46: #{tpu_custom_call.1} parent=5 // pred_check_branch
        %316 = sbr.rel (%p314) target = $region48
      $region47: #{tpu_custom_call.1} parent=5 // pred_region
        %s317 = ssub.s32 %s9, 2
      $region48: #{tpu_custom_call.1} parent=5 // pred_fallthru
        _
    $region6: #{tpu_custom_call.1} parent=1 // loop_footer
      %s13 = sadd.s32 1, %s9
    $region7: #{tpu_custom_call.1} parent=1 // loop_footer_branch
      %8 = sbr.rel target = $region3
    $region8: #{tpu_custom_call.1} parent=1 // loop_exit
      _
    %318 = vsyncpa [#allocation4], 1
    %s319 = scalar_lea.sflag [#allocation4], 1
    %320 = vsyncpa %s319, 1

</llo_original>
